<compile_context>
chip_gen: v5e
topology: v5e:2x2
jax: 0.10.0
libtpu: 0.0.40
codegen_flags: <defaults>
</compile_context>

<pallas_src>
import functools

import jax
import jax.numpy as jnp
from jax.experimental import pallas as pl
from jax.experimental.pallas import tpu as pltpu


def _conv2_fused_kernel(x_ref, w1_ref, w2_ref, p_ref, o_ref, mid_ref, *,
                        stride, Ho, Wo):
    """Fused Conv2 forward for one batch element.

    x_ref  : (1, s, s, Hs, Ws, Cin)  phase-decomposed, zero-padded conv1 input
    w1_ref : (9*Cin, C)              conv1 weight, im2col rows = (dy, dx, ci)
    w2_ref : (9*C,   C)              conv2 weight, im2col rows = (dy, dx, ci)
    p_ref  : (4, C)                  rows: bias1, alpha1, bias2, alpha2
    o_ref  : (1, C, Ho*Wo)           output (NCHW with flattened spatial)
    mid_ref: (Ho+2, Wo+2, C) VMEM    zero-padded conv1 output (conv2 input)
    """
    s = stride
    cin = x_ref.shape[-1]
    c = w1_ref.shape[-1]

    # ----------------- conv1: single K = 9*Cin im2col contraction -----------
    cols = []
    for dy in range(3):
        p, a = dy % s, dy // s
        for dx in range(3):
            q, b = dx % s, dx // s
            # contiguous static slice of the (p, q) phase grid -> (Ho, Wo, Cin)
            patch = x_ref[0, p, q, a:a + Ho, b:b + Wo, :]
            cols.append(patch.reshape(Ho * Wo, cin))
    m1 = jnp.concatenate(cols, axis=-1)                        # (Ho*Wo, 9*Cin)
    y1 = jnp.dot(m1, w1_ref[...], preferred_element_type=jnp.float32)
    y1 = y1 + p_ref[0:1, :].astype(jnp.float32)                # bias1
    a1 = p_ref[1:2, :].astype(jnp.float32)                     # PReLU slope 1
    y1 = jnp.where(y1 > 0, y1, a1 * y1)                        # (Ho*Wo, C)

    # ---- zero-pad conv1 output in VMEM: intermediate never touches HBM -----
    mid_ref[...] = jnp.zeros_like(mid_ref)
    mid_ref[1:1 + Ho, 1:1 + Wo, :] = y1.reshape(Ho, Wo, c)

    # ----------------- conv2 (stride 1): single K = 9*C contraction ---------
    cols2 = []
    for dy in range(3):
        for dx in range(3):
            patch = mid_ref[dy:dy + Ho, dx:dx + Wo, :]         # (Ho, Wo, C)
            cols2.append(patch.reshape(Ho * Wo, c))
    m2 = jnp.concatenate(cols2, axis=-1)                       # (Ho*Wo, 9*C)
    y2 = jnp.dot(m2, w2_ref[...], preferred_element_type=jnp.float32)
    y2 = y2 + p_ref[2:3, :].astype(jnp.float32)                # bias2
    a2 = p_ref[3:4, :].astype(jnp.float32)                     # PReLU slope 2
    y2 = jnp.where(y2 > 0, y2, a2 * y2)                        # (Ho*Wo, C)

    # Lane-denser store: (C, Ho*Wo); the wrapper reshape to NCHW is free.
    o_ref[0] = y2.T.astype(o_ref.dtype)


def conv2_forward(x_nchw, params1, params2, stride=2):
    """Conv2.forward: conv1(stride)+PReLU -> conv2(stride 1)+PReLU. NCHW in/out."""
    w1, b1, a1 = params1          # w1: (3, 3, Cin, C)  HWIO
    w2, b2, a2 = params2          # w2: (3, 3, C,   C)  HWIO
    N, Cin, H, W = x_nchw.shape
    C = w1.shape[-1]
    s = int(stride)
    Ho = (H + 2 - 3) // s + 1
    Wo = (W + 2 - 3) // s + 1

    # Input-side glue (small, fuses into one XLA op chain): NCHW->NHWC,
    # zero pad=1 (rounded up to a multiple of s), space-to-depth phase grids so
    # every conv1 tap becomes a contiguous static slice inside the kernel.
    x = jnp.transpose(x_nchw, (0, 2, 3, 1))
    Hp, Wp = H + 2, W + 2
    Hs, Ws = -(-Hp // s), -(-Wp // s)
    xp = jnp.pad(x, ((0, 0), (1, 1 + Hs * s - Hp), (1, 1 + Ws * s - Wp), (0, 0)))
    x_sd = xp.reshape(N, Hs, s, Ws, s, Cin).transpose(0, 2, 4, 1, 3, 5)

    w1_mat = w1.reshape(9 * Cin, C)               # im2col weight layout
    w2_mat = w2.reshape(9 * C, C)
    params = jnp.stack([b1, a1, b2, a2], axis=0)  # (4, C): one tiny DMA

    kernel = functools.partial(_conv2_fused_kernel, stride=s, Ho=Ho, Wo=Wo)
    flops = 2 * N * Ho * Wo * 9 * (Cin * C + C * C)
    bytes_accessed = 4 * (x_sd.size + w1_mat.size + w2_mat.size + params.size
                          + N * C * Ho * Wo)

    out = pl.pallas_call(
        kernel,
        out_shape=jax.ShapeDtypeStruct((N, C, Ho * Wo), x_nchw.dtype),
        grid=(N,),
        in_specs=[
            pl.BlockSpec((1, s, s, Hs, Ws, Cin), lambda n: (n, 0, 0, 0, 0, 0)),
            pl.BlockSpec((9 * Cin, C), lambda n: (0, 0)),
            pl.BlockSpec((9 * C, C), lambda n: (0, 0)),
            pl.BlockSpec((4, C), lambda n: (0, 0)),
        ],
        out_specs=pl.BlockSpec((1, C, Ho * Wo), lambda n: (n, 0, 0)),
        scratch_shapes=[pltpu.VMEM((Ho + 2, Wo + 2, C), jnp.float32)],
        compiler_params=pltpu.CompilerParams(dimension_semantics=("parallel",)),
        cost_estimate=pl.CostEstimate(flops=flops, transcendentals=0,
                                      bytes_accessed=bytes_accessed),
    )(x_sd, w1_mat, w2_mat, params)

    return out.reshape(N, C, Ho, Wo)   # free metadata reshape -> NCHW


# ---------------- pure-JAX reference (for correctness check) ----------------
def _ref_conv_prelu(x_nhwc, w_hwio, bias, alpha, stride):
    y = jax.lax.conv_general_dilated(
        x_nhwc, w_hwio, window_strides=(stride, stride),
        padding=((1, 1), (1, 1)),
        dimension_numbers=("NHWC", "HWIO", "NHWC"))
    y = y + bias
    return jnp.where(y > 0, y, alpha * y)


if __name__ == "__main__":
    in_planes, out_planes = 4, 8
    N, H, W = 2, 16, 16
    stride = 2

    key = jax.random.PRNGKey(0)
    k1, k2, k3, k4, k5 = jax.random.split(key, 5)
    x = jax.random.normal(k1, (N, in_planes, H, W), jnp.float32)

    # deterministic synthetic parameters (shapes from Conv2.__init__)
    w1 = 0.1 * jax.random.normal(k2, (3, 3, in_planes, out_planes), jnp.float32)
    b1 = 0.1 * jax.random.normal(k3, (out_planes,), jnp.float32)
    a1 = jnp.full((out_planes,), 0.25, jnp.float32)   # PReLU default init
    w2 = 0.1 * jax.random.normal(k4, (3, 3, out_planes, out_planes), jnp.float32)
    b2 = 0.1 * jax.random.normal(k5, (out_planes,), jnp.float32)
    a2 = jnp.full((out_planes,), 0.25, jnp.float32)

    out = conv2_forward(x, (w1, b1, a1), (w2, b2, a2), stride=stride)
    out = jax.block_until_ready(out)

    # correctness check against XLA conv
    xh = jnp.transpose(x, (0, 2, 3, 1))
    r = _ref_conv_prelu(xh, w1, b1, a1, stride)
    r = _ref_conv_prelu(r, w2, b2, a2, 1)
    r = jnp.transpose(r, (0, 3, 1, 2))

    assert out.shape == (N, out_planes, H // stride, W // stride), out.shape
    assert jnp.allclose(out, r, atol=1e-4, rtol=1e-4), float(jnp.max(jnp.abs(out - r)))
    print("KERNEL_OK")
</pallas_src>

<mosaic_0001>
module attributes {stable_mosaic.version = 11 : i64} {
  func.func @_conv2_fused_kernel(%arg0: i32, %arg1: memref<1x2x2x9x9x4xf32, #tpu.memory_space<vmem>>, %arg2: memref<36x8xf32, #tpu.memory_space<vmem>>, %arg3: memref<72x8xf32, #tpu.memory_space<vmem>>, %arg4: memref<4x8xf32, #tpu.memory_space<vmem>>, %arg5: memref<1x8x64xf32, #tpu.memory_space<vmem>>, %arg6: memref<10x10x8xf32, #tpu.memory_space<vmem>>) attributes {dimension_semantics = [#tpu.dimension_semantics<parallel>], iteration_bounds = array<i64: 2>, scalar_prefetch = 0 : i64, scratch_operands = 1 : i64, tpu.core_type = #tpu.core_type<tc>, window_params = [{transform_indices = @transform_0, window_bounds = array<i64: 1, 2, 2, 9, 9, 4>}, {pipeline_mode = #tpu.pipeline_mode<synchronous>, transform_indices = @transform_1, window_bounds = array<i64: 36, 8>}, {pipeline_mode = #tpu.pipeline_mode<synchronous>, transform_indices = @transform_2, window_bounds = array<i64: 72, 8>}, {pipeline_mode = #tpu.pipeline_mode<synchronous>, transform_indices = @transform_3, window_bounds = array<i64: 4, 8>}, {transform_indices = @transform_4, window_bounds = array<i64: 1, 8, 64>}]} {
    %c0 = arith.constant 0 : index
    %c0_0 = arith.constant 0 : index
    %c0_1 = arith.constant 0 : index
    %c0_2 = arith.constant 0 : index
    %c0_3 = arith.constant 0 : index
    %c0_4 = arith.constant 0 : index
    %0 = vector.load %arg1[%c0, %c0_0, %c0_1, %c0_2, %c0_3, %c0_4] : memref<1x2x2x9x9x4xf32, #tpu.memory_space<vmem>>, vector<1x1x1x8x8x4xf32>
    %1 = vector.shape_cast %0 : vector<1x1x1x8x8x4xf32> to vector<8x8x4xf32>
    %2 = vector.shape_cast %1 : vector<8x8x4xf32> to vector<64x4xf32>
    %c0_5 = arith.constant 0 : index
    %c0_6 = arith.constant 0 : index
    %c1 = arith.constant 1 : index
    %c0_7 = arith.constant 0 : index
    %c0_8 = arith.constant 0 : index
    %c0_9 = arith.constant 0 : index
    %3 = vector.load %arg1[%c0_5, %c0_6, %c1, %c0_7, %c0_8, %c0_9] : memref<1x2x2x9x9x4xf32, #tpu.memory_space<vmem>>, vector<1x1x1x8x8x4xf32>
    %4 = vector.shape_cast %3 : vector<1x1x1x8x8x4xf32> to vector<8x8x4xf32>
    %5 = vector.shape_cast %4 : vector<8x8x4xf32> to vector<64x4xf32>
    %c0_10 = arith.constant 0 : index
    %c0_11 = arith.constant 0 : index
    %c0_12 = arith.constant 0 : index
    %c0_13 = arith.constant 0 : index
    %c1_14 = arith.constant 1 : index
    %c0_15 = arith.constant 0 : index
    %6 = vector.load %arg1[%c0_10, %c0_11, %c0_12, %c0_13, %c1_14, %c0_15] : memref<1x2x2x9x9x4xf32, #tpu.memory_space<vmem>>, vector<1x1x1x8x8x4xf32>
    %7 = vector.shape_cast %6 : vector<1x1x1x8x8x4xf32> to vector<8x8x4xf32>
    %8 = vector.shape_cast %7 : vector<8x8x4xf32> to vector<64x4xf32>
    %c0_16 = arith.constant 0 : index
    %c1_17 = arith.constant 1 : index
    %c0_18 = arith.constant 0 : index
    %c0_19 = arith.constant 0 : index
    %c0_20 = arith.constant 0 : index
    %c0_21 = arith.constant 0 : index
    %9 = vector.load %arg1[%c0_16, %c1_17, %c0_18, %c0_19, %c0_20, %c0_21] : memref<1x2x2x9x9x4xf32, #tpu.memory_space<vmem>>, vector<1x1x1x8x8x4xf32>
    %10 = vector.shape_cast %9 : vector<1x1x1x8x8x4xf32> to vector<8x8x4xf32>
    %11 = vector.shape_cast %10 : vector<8x8x4xf32> to vector<64x4xf32>
    %c0_22 = arith.constant 0 : index
    %c1_23 = arith.constant 1 : index
    %c1_24 = arith.constant 1 : index
    %c0_25 = arith.constant 0 : index
    %c0_26 = arith.constant 0 : index
    %c0_27 = arith.constant 0 : index
    %12 = vector.load %arg1[%c0_22, %c1_23, %c1_24, %c0_25, %c0_26, %c0_27] : memref<1x2x2x9x9x4xf32, #tpu.memory_space<vmem>>, vector<1x1x1x8x8x4xf32>
    %13 = vector.shape_cast %12 : vector<1x1x1x8x8x4xf32> to vector<8x8x4xf32>
    %14 = vector.shape_cast %13 : vector<8x8x4xf32> to vector<64x4xf32>
    %c0_28 = arith.constant 0 : index
    %c1_29 = arith.constant 1 : index
    %c0_30 = arith.constant 0 : index
    %c0_31 = arith.constant 0 : index
    %c1_32 = arith.constant 1 : index
    %c0_33 = arith.constant 0 : index
    %15 = vector.load %arg1[%c0_28, %c1_29, %c0_30, %c0_31, %c1_32, %c0_33] : memref<1x2x2x9x9x4xf32, #tpu.memory_space<vmem>>, vector<1x1x1x8x8x4xf32>
    %16 = vector.shape_cast %15 : vector<1x1x1x8x8x4xf32> to vector<8x8x4xf32>
    %17 = vector.shape_cast %16 : vector<8x8x4xf32> to vector<64x4xf32>
    %c0_34 = arith.constant 0 : index
    %c0_35 = arith.constant 0 : index
    %c0_36 = arith.constant 0 : index
    %c1_37 = arith.constant 1 : index
    %c0_38 = arith.constant 0 : index
    %c0_39 = arith.constant 0 : index
    %18 = vector.load %arg1[%c0_34, %c0_35, %c0_36, %c1_37, %c0_38, %c0_39] : memref<1x2x2x9x9x4xf32, #tpu.memory_space<vmem>>, vector<1x1x1x8x8x4xf32>
    %19 = vector.shape_cast %18 : vector<1x1x1x8x8x4xf32> to vector<8x8x4xf32>
    %20 = vector.shape_cast %19 : vector<8x8x4xf32> to vector<64x4xf32>
    %c0_40 = arith.constant 0 : index
    %c0_41 = arith.constant 0 : index
    %c1_42 = arith.constant 1 : index
    %c1_43 = arith.constant 1 : index
    %c0_44 = arith.constant 0 : index
    %c0_45 = arith.constant 0 : index
    %21 = vector.load %arg1[%c0_40, %c0_41, %c1_42, %c1_43, %c0_44, %c0_45] : memref<1x2x2x9x9x4xf32, #tpu.memory_space<vmem>>, vector<1x1x1x8x8x4xf32>
    %22 = vector.shape_cast %21 : vector<1x1x1x8x8x4xf32> to vector<8x8x4xf32>
    %23 = vector.shape_cast %22 : vector<8x8x4xf32> to vector<64x4xf32>
    %c0_46 = arith.constant 0 : index
    %c0_47 = arith.constant 0 : index
    %c0_48 = arith.constant 0 : index
    %c1_49 = arith.constant 1 : index
    %c1_50 = arith.constant 1 : index
    %c0_51 = arith.constant 0 : index
    %24 = vector.load %arg1[%c0_46, %c0_47, %c0_48, %c1_49, %c1_50, %c0_51] : memref<1x2x2x9x9x4xf32, #tpu.memory_space<vmem>>, vector<1x1x1x8x8x4xf32>
    %25 = vector.shape_cast %24 : vector<1x1x1x8x8x4xf32> to vector<8x8x4xf32>
    %26 = vector.shape_cast %25 : vector<8x8x4xf32> to vector<64x4xf32>
    %27 = tpu.concatenate %2, %5, %8, %11, %14, %17, %20, %23, %26 in 1 : vector<64x4xf32>, vector<64x4xf32>, vector<64x4xf32>, vector<64x4xf32>, vector<64x4xf32>, vector<64x4xf32>, vector<64x4xf32>, vector<64x4xf32>, vector<64x4xf32> -> vector<64x36xf32>
    %c0_52 = arith.constant 0 : index
    %c0_53 = arith.constant 0 : index
    %28 = vector.load %arg2[%c0_52, %c0_53] : memref<36x8xf32, #tpu.memory_space<vmem>>, vector<36x8xf32>
    %cst = arith.constant dense<0.000000e+00> : vector<64x8xf32>
    %29 = tpu.matmul %27, %28, %cst {dimension_numbers = #tpu.dot_dimension_numbers<[1], [0], [0], [1], [0, 0, 1, 1], [], []>} : vector<64x36xf32>, vector<36x8xf32>, vector<64x8xf32> -> vector<64x8xf32>
    %c0_54 = arith.constant 0 : index
    %c0_55 = arith.constant 0 : index
    %30 = vector.load %arg4[%c0_54, %c0_55] : memref<4x8xf32, #tpu.memory_space<vmem>>, vector<1x8xf32>
    %31 = vector.broadcast %30 : vector<1x8xf32> to vector<64x8xf32>
    %32 = arith.addf %29, %31 : vector<64x8xf32>
    %c1_56 = arith.constant 1 : index
    %c0_57 = arith.constant 0 : index
    %33 = vector.load %arg4[%c1_56, %c0_57] : memref<4x8xf32, #tpu.memory_space<vmem>>, vector<1x8xf32>
    %cst_58 = arith.constant 0.000000e+00 : f32
    %34 = vector.broadcast %cst_58 : f32 to vector<64x8xf32>
    %35 = arith.cmpf ogt, %32, %34 : vector<64x8xf32>
    %36 = vector.broadcast %33 : vector<1x8xf32> to vector<64x8xf32>
    %37 = arith.mulf %36, %32 : vector<64x8xf32>
    %38 = arith.select %35, %32, %37 : vector<64x8xi1>, vector<64x8xf32>
    %cst_59 = arith.constant 0.000000e+00 : f32
    %39 = vector.broadcast %cst_59 : f32 to vector<10x10x8xf32>
    %c0_60 = arith.constant 0 : index
    %c0_61 = arith.constant 0 : index
    %c0_62 = arith.constant 0 : index
    %40 = vector.load %arg6[%c0_60, %c0_61, %c0_62] : memref<10x10x8xf32, #tpu.memory_space<vmem>>, vector<10x10x8xf32>
    tpu.vector_store %arg6[%c0_60, %c0_61, %c0_62], %39 {strides = array<i32>} : memref<10x10x8xf32, #tpu.memory_space<vmem>>, vector<10x10x8xf32>,
    %41 = vector.shape_cast %38 : vector<64x8xf32> to vector<8x8x8xf32>
    %c1_63 = arith.constant 1 : index
    %c1_64 = arith.constant 1 : index
    %c0_65 = arith.constant 0 : index
    %42 = vector.load %arg6[%c1_63, %c1_64, %c0_65] : memref<10x10x8xf32, #tpu.memory_space<vmem>>, vector<8x8x8xf32>
    tpu.vector_store %arg6[%c1_63, %c1_64, %c0_65], %41 {strides = array<i32>} : memref<10x10x8xf32, #tpu.memory_space<vmem>>, vector<8x8x8xf32>,
    %c0_66 = arith.constant 0 : index
    %c0_67 = arith.constant 0 : index
    %c0_68 = arith.constant 0 : index
    %43 = vector.load %arg6[%c0_66, %c0_67, %c0_68] : memref<10x10x8xf32, #tpu.memory_space<vmem>>, vector<8x8x8xf32>
    %44 = vector.shape_cast %43 : vector<8x8x8xf32> to vector<64x8xf32>
    %c0_69 = arith.constant 0 : index
    %c1_70 = arith.constant 1 : index
    %c0_71 = arith.constant 0 : index
    %45 = vector.load %arg6[%c0_69, %c1_70, %c0_71] : memref<10x10x8xf32, #tpu.memory_space<vmem>>, vector<8x8x8xf32>
    %46 = vector.shape_cast %45 : vector<8x8x8xf32> to vector<64x8xf32>
    %c0_72 = arith.constant 0 : index
    %c2 = arith.constant 2 : index
    %c0_73 = arith.constant 0 : index
    %47 = vector.load %arg6[%c0_72, %c2, %c0_73] : memref<10x10x8xf32, #tpu.memory_space<vmem>>, vector<8x8x8xf32>
    %48 = vector.shape_cast %47 : vector<8x8x8xf32> to vector<64x8xf32>
    %c1_74 = arith.constant 1 : index
    %c0_75 = arith.constant 0 : index
    %c0_76 = arith.constant 0 : index
    %49 = vector.load %arg6[%c1_74, %c0_75, %c0_76] : memref<10x10x8xf32, #tpu.memory_space<vmem>>, vector<8x8x8xf32>
    %50 = vector.shape_cast %49 : vector<8x8x8xf32> to vector<64x8xf32>
    %c1_77 = arith.constant 1 : index
    %c1_78 = arith.constant 1 : index
    %c0_79 = arith.constant 0 : index
    %51 = vector.load %arg6[%c1_77, %c1_78, %c0_79] : memref<10x10x8xf32, #tpu.memory_space<vmem>>, vector<8x8x8xf32>
    %52 = vector.shape_cast %51 : vector<8x8x8xf32> to vector<64x8xf32>
    %c1_80 = arith.constant 1 : index
    %c2_81 = arith.constant 2 : index
    %c0_82 = arith.constant 0 : index
    %53 = vector.load %arg6[%c1_80, %c2_81, %c0_82] : memref<10x10x8xf32, #tpu.memory_space<vmem>>, vector<8x8x8xf32>
    %54 = vector.shape_cast %53 : vector<8x8x8xf32> to vector<64x8xf32>
    %c2_83 = arith.constant 2 : index
    %c0_84 = arith.constant 0 : index
    %c0_85 = arith.constant 0 : index
    %55 = vector.load %arg6[%c2_83, %c0_84, %c0_85] : memref<10x10x8xf32, #tpu.memory_space<vmem>>, vector<8x8x8xf32>
    %56 = vector.shape_cast %55 : vector<8x8x8xf32> to vector<64x8xf32>
    %c2_86 = arith.constant 2 : index
    %c1_87 = arith.constant 1 : index
    %c0_88 = arith.constant 0 : index
    %57 = vector.load %arg6[%c2_86, %c1_87, %c0_88] : memref<10x10x8xf32, #tpu.memory_space<vmem>>, vector<8x8x8xf32>
    %58 = vector.shape_cast %57 : vector<8x8x8xf32> to vector<64x8xf32>
    %c2_89 = arith.constant 2 : index
    %c2_90 = arith.constant 2 : index
    %c0_91 = arith.constant 0 : index
    %59 = vector.load %arg6[%c2_89, %c2_90, %c0_91] : memref<10x10x8xf32, #tpu.memory_space<vmem>>, vector<8x8x8xf32>
    %60 = vector.shape_cast %59 : vector<8x8x8xf32> to vector<64x8xf32>
    %61 = tpu.concatenate %44, %46, %48, %50, %52, %54, %56, %58, %60 in 1 : vector<64x8xf32>, vector<64x8xf32>, vector<64x8xf32>, vector<64x8xf32>, vector<64x8xf32>, vector<64x8xf32>, vector<64x8xf32>, vector<64x8xf32>, vector<64x8xf32> -> vector<64x72xf32>
    %c0_92 = arith.constant 0 : index
    %c0_93 = arith.constant 0 : index
    %62 = vector.load %arg3[%c0_92, %c0_93] : memref<72x8xf32, #tpu.memory_space<vmem>>, vector<72x8xf32>
    %cst_94 = arith.constant dense<0.000000e+00> : vector<64x8xf32>
    %63 = tpu.matmul %61, %62, %cst_94 {dimension_numbers = #tpu.dot_dimension_numbers<[1], [0], [0], [1], [0, 0, 1, 1], [], []>} : vector<64x72xf32>, vector<72x8xf32>, vector<64x8xf32> -> vector<64x8xf32>
    %c2_95 = arith.constant 2 : index
    %c0_96 = arith.constant 0 : index
    %64 = vector.load %arg4[%c2_95, %c0_96] : memref<4x8xf32, #tpu.memory_space<vmem>>, vector<1x8xf32>
    %65 = vector.broadcast %64 : vector<1x8xf32> to vector<64x8xf32>
    %66 = arith.addf %63, %65 : vector<64x8xf32>
    %c3 = arith.constant 3 : index
    %c0_97 = arith.constant 0 : index
    %67 = vector.load %arg4[%c3, %c0_97] : memref<4x8xf32, #tpu.memory_space<vmem>>, vector<1x8xf32>
    %cst_98 = arith.constant 0.000000e+00 : f32
    %68 = vector.broadcast %cst_98 : f32 to vector<64x8xf32>
    %69 = arith.cmpf ogt, %66, %68 : vector<64x8xf32>
    %70 = vector.broadcast %67 : vector<1x8xf32> to vector<64x8xf32>
    %71 = arith.mulf %70, %66 : vector<64x8xf32>
    %72 = arith.select %69, %66, %71 : vector<64x8xi1>, vector<64x8xf32>
    %73 = tpu.transpose %72, [1, 0] : vector<64x8xf32> -> vector<8x64xf32>
    %c0_99 = arith.constant 0 : index
    %c0_100 = arith.constant 0 : index
    %c0_101 = arith.constant 0 : index
    %74 = vector.load %arg5[%c0_99, %c0_100, %c0_101] : memref<1x8x64xf32, #tpu.memory_space<vmem>>, vector<1x8x64xf32>
    %75 = vector.shape_cast %74 : vector<1x8x64xf32> to vector<8x64xf32>
    %76 = vector.shape_cast %73 : vector<8x64xf32> to vector<1x8x64xf32>
    tpu.vector_store %arg5[%c0_99, %c0_100, %c0_101], %76 {strides = array<i32>} : memref<1x8x64xf32, #tpu.memory_space<vmem>>, vector<1x8x64xf32>,
    return
  }
  func.func @transform_0(%arg0: i32) -> (i32, i32, i32, i32, i32, i32) {
    %c0_i32 = arith.constant 0 : i32
    %c0_i32_0 = arith.constant 0 : i32
    %c0_i32_1 = arith.constant 0 : i32
    %c0_i32_2 = arith.constant 0 : i32
    %c0_i32_3 = arith.constant 0 : i32
    %c0_i32_4 = arith.constant 0 : i32
    return %arg0, %c0_i32, %c0_i32_0, %c0_i32_1, %c0_i32_2, %c0_i32_3 : i32, i32, i32, i32, i32, i32
  }
  func.func @transform_1(%arg0: i32) -> (i32, i32) {
    %c0_i32 = arith.constant 0 : i32
    %c0_i32_0 = arith.constant 0 : i32
    %c0_i32_1 = arith.constant 0 : i32
    return %c0_i32, %c0_i32_0 : i32, i32
  }
  func.func @transform_2(%arg0: i32) -> (i32, i32) {
    %c0_i32 = arith.constant 0 : i32
    %c0_i32_0 = arith.constant 0 : i32
    %c0_i32_1 = arith.constant 0 : i32
    return %c0_i32, %c0_i32_0 : i32, i32
  }
  func.func @transform_3(%arg0: i32) -> (i32, i32) {
    %c0_i32 = arith.constant 0 : i32
    %c0_i32_0 = arith.constant 0 : i32
    %c0_i32_1 = arith.constant 0 : i32
    return %c0_i32, %c0_i32_0 : i32, i32
  }
  func.func @transform_4(%arg0: i32) -> (i32, i32, i32) {
    %c0_i32 = arith.constant 0 : i32
    %c0_i32_0 = arith.constant 0 : i32
    %c0_i32_1 = arith.constant 0 : i32
    return %arg0, %c0_i32, %c0_i32_0 : i32, i32, i32
  }
}

</mosaic_0001>

<llo_original>
// kernel: tpu_custom_call.1
$region0: #{tpu_custom_call.1}
  #allocation0 [shape = 'u32[]', space=smem, size = 0x4, offset = 0x4, fixed_abs, tag = 'smem constant byte address 0x4 - core index']
  #allocation1 [shape = 'u32[72,128]{1,0:T(1,128)}', space=vmem, size = 0x9000, scoped, tag = 'internal scratch']
  #allocation2 [shape = 'f32[10,10,8]{2,1,0:T(8,128)}', space=vmem, size = 0x14000, scoped, tag = 'scratch operand']
  %s0 = inlined_call_operand.vmem [shape: f32[2,2,2,9,9,4], index: 0, kind: input, shape index: {}]
  %s1 = inlined_call_operand.vmem [shape: f32[36,8], index: 1, kind: input, shape index: {}]
  %s2 = inlined_call_operand.vmem [shape: f32[72,8], index: 2, kind: input, shape index: {}]
  %s3 = inlined_call_operand.vmem [shape: f32[4,8], index: 3, kind: input, shape index: {}]
  %s4 = inlined_call_operand.hbm [shape: f32[2,8,64], index: 4, kind: output, shape index: {}]
  %s5 = sld [smem:[#allocation0]]
  $region49: #{tpu_custom_call.1} parent=0
    _
  %s7 = ssub.s32 1, %s5
  %s8 = scalar_select 0, %s7, %s5
  $region1: #{tpu_custom_call.1} parent=0
    #allocation3 [shape = 'u8[8192]{0}', space=vmem, size = 0x2000, scoped, tag = 'output window, operand 0']
    #allocation4 [shape = 's32[2]{0}', space=sflag, size = 0x8, scoped, tag = 'scoped memory for tpu_custom_call.1']
    %9 = vsyncpa [#allocation4], 0
    %s10 = scalar_lea.sflag [#allocation4], 1
    %11 = vsyncpa %s10, 0
    loop: start=0, step=1, limit=4
    $region2: #{tpu_custom_call.1} parent=1 // loop_pre_header
      _
    $region3: #{tpu_custom_call.1} parent=1 // loop_header
      %s13 = sphi 0, %s17
      %p14 = scmp.ge.s32.totalorder %s13, 4
      %s23 = sphi 0, %s25
      %s26 = sphi 0, %s23
      %s27 = sphi 0, %s26
      %s43 = sphi 0, %s27
      %s47 = sphi 0, %s47
      %s49 = sphi 0, %s47
      %s50 = sphi 0, %s49
      %s64 = sphi 0, %s50
      %s68 = sphi 0, %s68
      %s70 = sphi 0, %s68
      %s71 = sphi 0, %s70
      %s85 = sphi 0, %s71
      %s89 = sphi 0, %s89
      %s91 = sphi 0, %s89
      %s92 = sphi 0, %s91
      %s106 = sphi 0, %s92
      %s112 = sphi 0, %s114
      %s115 = sphi 0, %s112
      %s116 = sphi 0, %s115
      %s132 = sphi 0, %s116
    $region4: #{tpu_custom_call.1} parent=1 // loop_header_branch
      %16 = sbr.rel (%p14) target = $region8
    $region5: #{tpu_custom_call.1} parent=1 // loop_body
      %s18 = ssub.s32 %s13, 1
      %s19 = ssub.s32 %s13, 2
      %s20 = sadd.s32 %s13, 1
      %s21 = ssub.s32 %s13, %s20
      %p22 = scmp.eq.s32.totalorder %s21, 0
      %s24 = sadd.s32 %s23, 1
      %s25 = scalar_select %p22, %s23, %s24
      %p28 = pneg %p22
      %p29 = scmp.eq.s32.totalorder %s13, 1
      %p30 = por %p28, %p29
      %p31 = scmp.ne.s32.totalorder %s23, %s26
      %p32 = scmp.eq.s32.totalorder %s13, 0
      %p33 = por %p31, %p32
      %p34 = scmp.ne.s32.totalorder %s23, %s26
      %p35 = scmp.eq.s32.totalorder %s18, 1
      %p36 = por %p34, %p35
      %p37 = scmp.ne.s32.totalorder %s26, %s27
      %p38 = scmp.eq.s32.totalorder %s18, 0
      %p39 = por %p37, %p38
      %p40 = scmp.ne.s32.totalorder %s26, %s27
      %p41 = scmp.eq.s32.totalorder %s19, 1
      %p42 = por %p40, %p41
      %p44 = scmp.ne.s32.totalorder %s27, %s43
      %p45 = scmp.eq.s32.totalorder %s19, 0
      %p46 = por %p44, %p45
      %s48 = sadd.s32 %s47, 1
      %p51 = scmp.eq.s32.totalorder %s13, 1
      %p52 = scmp.ne.s32.totalorder %s47, %s49
      %p53 = scmp.eq.s32.totalorder %s13, 0
      %p54 = por %p52, %p53
      %p55 = scmp.ne.s32.totalorder %s47, %s49
      %p56 = scmp.eq.s32.totalorder %s18, 1
      %p57 = por %p55, %p56
      %p58 = scmp.ne.s32.totalorder %s49, %s50
      %p59 = scmp.eq.s32.totalorder %s18, 0
      %p60 = por %p58, %p59
      %p61 = scmp.ne.s32.totalorder %s49, %s50
      %p62 = scmp.eq.s32.totalorder %s19, 1
      %p63 = por %p61, %p62
      %p65 = scmp.ne.s32.totalorder %s50, %s64
      %p66 = scmp.eq.s32.totalorder %s19, 0
      %p67 = por %p65, %p66
      %s69 = sadd.s32 %s68, 1
      %p72 = scmp.eq.s32.totalorder %s13, 1
      %p73 = scmp.ne.s32.totalorder %s68, %s70
      %p74 = scmp.eq.s32.totalorder %s13, 0
      %p75 = por %p73, %p74
      %p76 = scmp.ne.s32.totalorder %s68, %s70
      %p77 = scmp.eq.s32.totalorder %s18, 1
      %p78 = por %p76, %p77
      %p79 = scmp.ne.s32.totalorder %s70, %s71
      %p80 = scmp.eq.s32.totalorder %s18, 0
      %p81 = por %p79, %p80
      %p82 = scmp.ne.s32.totalorder %s70, %s71
      %p83 = scmp.eq.s32.totalorder %s19, 1
      %p84 = por %p82, %p83
      %p86 = scmp.ne.s32.totalorder %s71, %s85
      %p87 = scmp.eq.s32.totalorder %s19, 0
      %p88 = por %p86, %p87
      %s90 = sadd.s32 %s89, 1
      %p93 = scmp.eq.s32.totalorder %s13, 1
      %p94 = scmp.ne.s32.totalorder %s89, %s91
      %p95 = scmp.eq.s32.totalorder %s13, 0
      %p96 = por %p94, %p95
      %p97 = scmp.ne.s32.totalorder %s89, %s91
      %p98 = scmp.eq.s32.totalorder %s18, 1
      %p99 = por %p97, %p98
      %p100 = scmp.ne.s32.totalorder %s91, %s92
      %p101 = scmp.eq.s32.totalorder %s18, 0
      %p102 = por %p100, %p101
      %p103 = scmp.ne.s32.totalorder %s91, %s92
      %p104 = scmp.eq.s32.totalorder %s19, 1
      %p105 = por %p103, %p104
      %p107 = scmp.ne.s32.totalorder %s92, %s106
      %p108 = scmp.eq.s32.totalorder %s19, 0
      %p109 = por %p107, %p108
      %s110 = ssub.s32 %s13, %s20
      %p111 = scmp.eq.s32.totalorder %s110, 0
      %s113 = sadd.s32 %s112, 1
      %s114 = scalar_select %p111, %s112, %s113
      %p117 = pneg %p111
      %p118 = scmp.eq.s32.totalorder %s13, 1
      %p119 = por %p117, %p118
      %p120 = scmp.ne.s32.totalorder %s112, %s115
      %p121 = scmp.eq.s32.totalorder %s13, 0
      %p122 = por %p120, %p121
      %p123 = scmp.ne.s32.totalorder %s112, %s115
      %p124 = scmp.eq.s32.totalorder %s18, 1
      %p125 = por %p123, %p124
      %p126 = scmp.ne.s32.totalorder %s115, %s116
      %p127 = scmp.eq.s32.totalorder %s18, 0
      %p128 = por %p126, %p127
      %p129 = scmp.ne.s32.totalorder %s115, %s116
      %p130 = scmp.eq.s32.totalorder %s19, 1
      %p131 = por %p129, %p130
      %p133 = scmp.ne.s32.totalorder %s116, %s132
      %p134 = scmp.eq.s32.totalorder %s19, 0
      %p135 = por %p133, %p134
      %p136 = scmp.le.s32.totalorder 1, %s13
      %p137 = scmp.lt.s32.totalorder %s13, 3
      %p138 = pnand %p136, %p137
      %p139 = pneg %p138
      // Predicated region
      $region9: #{tpu_custom_call.1} parent=5 // pred_check
        _
      $region10: #{tpu_custom_call.1} parent=5 // pred_check_branch
        %141 = sbr.rel (%p138) target = $region12
      $region11: #{tpu_custom_call.1} parent=5 // pred_region
        %s142 = ssub.s32 %s13, 1
        // Predicated region
        $region13: #{tpu_custom_call.1} parent=11 // pred_check
          %p143 = pneg %p60
        $region14: #{tpu_custom_call.1} parent=11 // pred_check_branch
          %145 = sbr.rel (%p143) target = $region16
        $region15: #{tpu_custom_call.1} parent=11 // pred_region
          _
        $region16: #{tpu_custom_call.1} parent=11 // pred_fallthru
          _
        // Predicated region
        $region17: #{tpu_custom_call.1} parent=11 // pred_check
          %p146 = pneg %p81
        $region18: #{tpu_custom_call.1} parent=11 // pred_check_branch
          %148 = sbr.rel (%p146) target = $region20
        $region19: #{tpu_custom_call.1} parent=11 // pred_region
          _
        $region20: #{tpu_custom_call.1} parent=11 // pred_fallthru
          _
        // Predicated region
        $region21: #{tpu_custom_call.1} parent=11 // pred_check
          %p149 = pneg %p102
        $region22: #{tpu_custom_call.1} parent=11 // pred_check_branch
          %151 = sbr.rel (%p149) target = $region24
        $region23: #{tpu_custom_call.1} parent=11 // pred_region
          _
        $region24: #{tpu_custom_call.1} parent=11 // pred_fallthru
          _
      $region12: #{tpu_custom_call.1} parent=5 // pred_fallthru
        _
      %p152 = scmp.lt.s32.totalorder %s13, 2
      // Predicated region
      $region25: #{tpu_custom_call.1} parent=5 // pred_check
        %p153 = pneg %p152
      $region26: #{tpu_custom_call.1} parent=5 // pred_check_branch
        %155 = sbr.rel (%p153) target = $region28
      $region27: #{tpu_custom_call.1} parent=5 // pred_region
        // Predicated region
        $region29: #{tpu_custom_call.1} parent=27 // pred_check
          %p156 = pneg %p33
        $region30: #{tpu_custom_call.1} parent=27 // pred_check_branch
          %158 = sbr.rel (%p156) target = $region32
        $region31: #{tpu_custom_call.1} parent=27 // pred_region
          %p159 = scmp.lt.s32.totalorder %s13, 1
          %s160 = scalar_select %p159, %s13, 1
          %s161 = smul.addr %s160, 72
          %s162 = smul.addr %s161, 8
          %s163 = scalar_lea.vmem %s0, %s162
        $region32: #{tpu_custom_call.1} parent=27 // pred_fallthru
          _
      $region28: #{tpu_custom_call.1} parent=5 // pred_fallthru
        _
      %p164 = scmp.le.s32.totalorder 1, %s13
      %p165 = scmp.lt.s32.totalorder %s13, 3
      %p166 = pnand %p164, %p165
      %p167 = pneg %p166
      // Predicated region
      $region33: #{tpu_custom_call.1} parent=5 // pred_check
        _
      $region34: #{tpu_custom_call.1} parent=5 // pred_check_branch
        %169 = sbr.rel (%p166) target = $region36
      $region35: #{tpu_custom_call.1} parent=5 // pred_region
        %s170 = ssub.s32 %s13, 1
        %p171 = scmp.lt.s32.totalorder %s18, 1
        %s172 = scalar_select %p171, %s18, 1
        %s173 = smul.addr %s172, 72
        %s174 = smul.addr %s173, 8
        %s175 = scalar_lea.vmem %s0, %s174
        %p176 = pneg %p39
        %p177 = pneg %p36
        %p178 = pneg %p60
        %p179 = pneg %p57
        %p180 = pneg %p81
        %p181 = pneg %p78
        %p182 = pneg %p102
        %p183 = pneg %p99
        %p184 = pneg %p128
        %p185 = pneg %p125
        %s186 = sand.u32 %s115, 1
        %s187 = scalar_lea.sflag [#allocation4], %s186
        %s188 = sand.u32 %s115, 1
        %s189 = smul.addr %s188, 8
        %s190 = scalar_lea.vmem [#allocation3], %s189
        %p191 = scmp.lt.s32.totalorder %s18, 1
        %s192 = scalar_select %p191, %s18, 1
        %s193 = smul.addr %s192, 72
        %s194 = smul.addr %s193, 8
        %s195 = scalar_lea.vmem %s0, %s194
        %v196 = vld [vmem:[%s195] sm:$0xff]
        %v197 = vld [vmem:[%s195 + $0x10] sm:$0xff]
        %v198 = vld [vmem:[%s195 + $0x20] sm:$0xff]
        %v199 = vld [vmem:[%s195 + $0x30] sm:$0xff]
        %v200 = vld [vmem:[%s195 + $0x40] sm:$0xff]
        %v201 = vld [vmem:[%s195 + $0x50] sm:$0xff]
        %v202 = vld [vmem:[%s195 + $0x60] sm:$0xff]
        %v203 = vld [vmem:[%s195 + $0x70] sm:$0xff]
        %s204 = scalar_lea.vmem %s195, 144
        %v205 = vld [vmem:[%s204] sm:$0xff]
        %v206 = vld [vmem:[%s204 + $0x10] sm:$0xff]
        %v207 = vld [vmem:[%s204 + $0x20] sm:$0xff]
        %v208 = vld [vmem:[%s204 + $0x30] sm:$0xff]
        %v209 = vld [vmem:[%s204 + $0x40] sm:$0xff]
        %v210 = vld [vmem:[%s204 + $0x50] sm:$0xff]
        %v211 = vld [vmem:[%s204 + $0x60] sm:$0xff]
        %v212 = vld [vmem:[%s204 + $0x70] sm:$0xff]
        %v213 = vld [vmem:[%s195 + $0x1] sm:$0xff]
        %v214 = vld [vmem:[%s195 + $0x11] sm:$0xff]
        %v215 = vld [vmem:[%s195 + $0x21] sm:$0xff]
        %v216 = vld [vmem:[%s195 + $0x31] sm:$0xff]
        %v217 = vld [vmem:[%s195 + $0x41] sm:$0xff]
        %v218 = vld [vmem:[%s195 + $0x51] sm:$0xff]
        %v219 = vld [vmem:[%s195 + $0x61] sm:$0xff]
        %v220 = vld [vmem:[%s195 + $0x71] sm:$0xff]
        %s221 = scalar_lea.vmem %s195, 288
        %v222 = vld [vmem:[%s221] sm:$0xff]
        %v223 = vld [vmem:[%s221 + $0x10] sm:$0xff]
        %v224 = vld [vmem:[%s221 + $0x20] sm:$0xff]
        %v225 = vld [vmem:[%s221 + $0x30] sm:$0xff]
        %v226 = vld [vmem:[%s221 + $0x40] sm:$0xff]
        %v227 = vld [vmem:[%s221 + $0x50] sm:$0xff]
        %v228 = vld [vmem:[%s221 + $0x60] sm:$0xff]
        %v229 = vld [vmem:[%s221 + $0x70] sm:$0xff]
        %s230 = scalar_lea.vmem %s195, 432
        %v231 = vld [vmem:[%s230] sm:$0xff]
        %v232 = vld [vmem:[%s230 + $0x10] sm:$0xff]
        %v233 = vld [vmem:[%s230 + $0x20] sm:$0xff]
        %v234 = vld [vmem:[%s230 + $0x30] sm:$0xff]
        %v235 = vld [vmem:[%s230 + $0x40] sm:$0xff]
        %v236 = vld [vmem:[%s230 + $0x50] sm:$0xff]
        %v237 = vld [vmem:[%s230 + $0x60] sm:$0xff]
        %v238 = vld [vmem:[%s230 + $0x70] sm:$0xff]
        %v239 = vld [vmem:[%s221 + $0x1] sm:$0xff]
        %v240 = vld [vmem:[%s221 + $0x11] sm:$0xff]
        %v241 = vld [vmem:[%s221 + $0x21] sm:$0xff]
        %v242 = vld [vmem:[%s221 + $0x31] sm:$0xff]
        %v243 = vld [vmem:[%s221 + $0x41] sm:$0xff]
        %v244 = vld [vmem:[%s221 + $0x51] sm:$0xff]
        %v245 = vld [vmem:[%s221 + $0x61] sm:$0xff]
        %v246 = vld [vmem:[%s221 + $0x71] sm:$0xff]
        %s247 = scalar_lea.vmem %s195, 16
        %v248 = vld [vmem:[%s247] sm:$0xff]
        %v249 = vld [vmem:[%s247 + $0x10] sm:$0xff]
        %v250 = vld [vmem:[%s247 + $0x20] sm:$0xff]
        %v251 = vld [vmem:[%s247 + $0x30] sm:$0xff]
        %v252 = vld [vmem:[%s247 + $0x40] sm:$0xff]
        %v253 = vld [vmem:[%s247 + $0x50] sm:$0xff]
        %v254 = vld [vmem:[%s247 + $0x60] sm:$0xff]
        %v255 = vld [vmem:[%s247 + $0x70] sm:$0xff]
        %s256 = scalar_lea.vmem %s195, 160
        %v257 = vld [vmem:[%s256] sm:$0xff]
        %v258 = vld [vmem:[%s256 + $0x10] sm:$0xff]
        %v259 = vld [vmem:[%s256 + $0x20] sm:$0xff]
        %v260 = vld [vmem:[%s256 + $0x30] sm:$0xff]
        %v261 = vld [vmem:[%s256 + $0x40] sm:$0xff]
        %v262 = vld [vmem:[%s256 + $0x50] sm:$0xff]
        %v263 = vld [vmem:[%s256 + $0x60] sm:$0xff]
        %v264 = vld [vmem:[%s256 + $0x70] sm:$0xff]
        %v265 = vld [vmem:[%s247 + $0x1] sm:$0xff]
        %v266 = vld [vmem:[%s247 + $0x11] sm:$0xff]
        %v267 = vld [vmem:[%s247 + $0x21] sm:$0xff]
        %v268 = vld [vmem:[%s247 + $0x31] sm:$0xff]
        %v269 = vld [vmem:[%s247 + $0x41] sm:$0xff]
        %v270 = vld [vmem:[%s247 + $0x51] sm:$0xff]
        %v271 = vld [vmem:[%s247 + $0x61] sm:$0xff]
        %v272 = vld [vmem:[%s247 + $0x71] sm:$0xff]
        %281 = vrot.lane.b32.xlu0 %v205, 4
        %v282 = vpop.permute.xlu0 %281
        %283 = vrot.lane.b32.xlu0 %v206, 4
        %v284 = vpop.permute.xlu0 %283
        %285 = vrot.lane.b32.xlu0 %v207, 4
        %v286 = vpop.permute.xlu0 %285
        %287 = vrot.lane.b32.xlu0 %v208, 4
        %v288 = vpop.permute.xlu0 %287
        %289 = vrot.lane.b32.xlu0 %v209, 4
        %v290 = vpop.permute.xlu0 %289
        %291 = vrot.lane.b32.xlu0 %v210, 4
        %v292 = vpop.permute.xlu0 %291
        %293 = vrot.lane.b32.xlu0 %v211, 4
        %v294 = vpop.permute.xlu0 %293
        %295 = vrot.lane.b32.xlu0 %v212, 4
        %v296 = vpop.permute.xlu0 %295
        %313 = vrot.lane.b32.xlu0 %v213, 8
        %v314 = vpop.permute.xlu0 %313
        %315 = vrot.lane.b32.xlu0 %v214, 8
        %v316 = vpop.permute.xlu0 %315
        %317 = vrot.lane.b32.xlu0 %v215, 8
        %v318 = vpop.permute.xlu0 %317
        %319 = vrot.lane.b32.xlu0 %v216, 8
        %v320 = vpop.permute.xlu0 %319
        %321 = vrot.lane.b32.xlu0 %v217, 8
        %v322 = vpop.permute.xlu0 %321
        %323 = vrot.lane.b32.xlu0 %v218, 8
        %v324 = vpop.permute.xlu0 %323
        %325 = vrot.lane.b32.xlu0 %v219, 8
        %v326 = vpop.permute.xlu0 %325
        %327 = vrot.lane.b32.xlu0 %v220, 8
        %v328 = vpop.permute.xlu0 %327
        %345 = vrot.lane.b32.xlu0 %v222, 12
        %v346 = vpop.permute.xlu0 %345
        %347 = vrot.lane.b32.xlu0 %v223, 12
        %v348 = vpop.permute.xlu0 %347
        %349 = vrot.lane.b32.xlu0 %v224, 12
        %v350 = vpop.permute.xlu0 %349
        %351 = vrot.lane.b32.xlu0 %v225, 12
        %v352 = vpop.permute.xlu0 %351
        %353 = vrot.lane.b32.xlu0 %v226, 12
        %v354 = vpop.permute.xlu0 %353
        %355 = vrot.lane.b32.xlu0 %v227, 12
        %v356 = vpop.permute.xlu0 %355
        %357 = vrot.lane.b32.xlu0 %v228, 12
        %v358 = vpop.permute.xlu0 %357
        %359 = vrot.lane.b32.xlu0 %v229, 12
        %v360 = vpop.permute.xlu0 %359
        %377 = vrot.lane.b32.xlu0 %v231, 16
        %v378 = vpop.permute.xlu0 %377
        %379 = vrot.lane.b32.xlu0 %v232, 16
        %v380 = vpop.permute.xlu0 %379
        %381 = vrot.lane.b32.xlu0 %v233, 16
        %v382 = vpop.permute.xlu0 %381
        %383 = vrot.lane.b32.xlu0 %v234, 16
        %v384 = vpop.permute.xlu0 %383
        %385 = vrot.lane.b32.xlu0 %v235, 16
        %v386 = vpop.permute.xlu0 %385
        %387 = vrot.lane.b32.xlu0 %v236, 16
        %v388 = vpop.permute.xlu0 %387
        %389 = vrot.lane.b32.xlu0 %v237, 16
        %v390 = vpop.permute.xlu0 %389
        %391 = vrot.lane.b32.xlu0 %v238, 16
        %v392 = vpop.permute.xlu0 %391
        %409 = vrot.lane.b32.xlu0 %v239, 20
        %v410 = vpop.permute.xlu0 %409
        %411 = vrot.lane.b32.xlu0 %v240, 20
        %v412 = vpop.permute.xlu0 %411
        %413 = vrot.lane.b32.xlu0 %v241, 20
        %v414 = vpop.permute.xlu0 %413
        %415 = vrot.lane.b32.xlu0 %v242, 20
        %v416 = vpop.permute.xlu0 %415
        %417 = vrot.lane.b32.xlu0 %v243, 20
        %v418 = vpop.permute.xlu0 %417
        %419 = vrot.lane.b32.xlu0 %v244, 20
        %v420 = vpop.permute.xlu0 %419
        %421 = vrot.lane.b32.xlu0 %v245, 20
        %v422 = vpop.permute.xlu0 %421
        %423 = vrot.lane.b32.xlu0 %v246, 20
        %v424 = vpop.permute.xlu0 %423
        %441 = vrot.lane.b32.xlu0 %v248, 24
        %v442 = vpop.permute.xlu0 %441
        %443 = vrot.lane.b32.xlu0 %v249, 24
        %v444 = vpop.permute.xlu0 %443
        %445 = vrot.lane.b32.xlu0 %v250, 24
        %v446 = vpop.permute.xlu0 %445
        %447 = vrot.lane.b32.xlu0 %v251, 24
        %v448 = vpop.permute.xlu0 %447
        %449 = vrot.lane.b32.xlu0 %v252, 24
        %v450 = vpop.permute.xlu0 %449
        %451 = vrot.lane.b32.xlu0 %v253, 24
        %v452 = vpop.permute.xlu0 %451
        %453 = vrot.lane.b32.xlu0 %v254, 24
        %v454 = vpop.permute.xlu0 %453
        %455 = vrot.lane.b32.xlu0 %v255, 24
        %v456 = vpop.permute.xlu0 %455
        %473 = vrot.lane.b32.xlu0 %v257, 28
        %v474 = vpop.permute.xlu0 %473
        %475 = vrot.lane.b32.xlu0 %v258, 28
        %v476 = vpop.permute.xlu0 %475
        %477 = vrot.lane.b32.xlu0 %v259, 28
        %v478 = vpop.permute.xlu0 %477
        %479 = vrot.lane.b32.xlu0 %v260, 28
        %v480 = vpop.permute.xlu0 %479
        %481 = vrot.lane.b32.xlu0 %v261, 28
        %v482 = vpop.permute.xlu0 %481
        %483 = vrot.lane.b32.xlu0 %v262, 28
        %v484 = vpop.permute.xlu0 %483
        %485 = vrot.lane.b32.xlu0 %v263, 28
        %v486 = vpop.permute.xlu0 %485
        %487 = vrot.lane.b32.xlu0 %v264, 28
        %v488 = vpop.permute.xlu0 %487
        %505 = vrot.lane.b32.xlu0 %v265, 32
        %v506 = vpop.permute.xlu0 %505
        %507 = vrot.lane.b32.xlu0 %v266, 32
        %v508 = vpop.permute.xlu0 %507
        %509 = vrot.lane.b32.xlu0 %v267, 32
        %v510 = vpop.permute.xlu0 %509
        %511 = vrot.lane.b32.xlu0 %v268, 32
        %v512 = vpop.permute.xlu0 %511
        %513 = vrot.lane.b32.xlu0 %v269, 32
        %v514 = vpop.permute.xlu0 %513
        %515 = vrot.lane.b32.xlu0 %v270, 32
        %v516 = vpop.permute.xlu0 %515
        %517 = vrot.lane.b32.xlu0 %v271, 32
        %v518 = vpop.permute.xlu0 %517
        %519 = vrot.lane.b32.xlu0 %v272, 32
        %v520 = vpop.permute.xlu0 %519
        %vm529 = vcmask 31744
        %v530 = vsel %vm529, %v196, %v282
        %v531 = vsel %vm529, %v197, %v284
        %v532 = vsel %vm529, %v198, %v286
        %v533 = vsel %vm529, %v199, %v288
        %v534 = vsel %vm529, %v200, %v290
        %v535 = vsel %vm529, %v201, %v292
        %v536 = vsel %vm529, %v202, %v294
        %v537 = vsel %vm529, %v203, %v296
        %vm538 = vcmask 64512
        %v539 = vsel %vm538, %v530, %v314
        %v540 = vsel %vm538, %v531, %v316
        %v541 = vsel %vm538, %v532, %v318
        %v542 = vsel %vm538, %v533, %v320
        %v543 = vsel %vm538, %v534, %v322
        %v544 = vsel %vm538, %v535, %v324
        %v545 = vsel %vm538, %v536, %v326
        %v546 = vsel %vm538, %v537, %v328
        %vm547 = vcmask 97280
        %v548 = vsel %vm547, %v539, %v346
        %v549 = vsel %vm547, %v540, %v348
        %v550 = vsel %vm547, %v541, %v350
        %v551 = vsel %vm547, %v542, %v352
        %v552 = vsel %vm547, %v543, %v354
        %v553 = vsel %vm547, %v544, %v356
        %v554 = vsel %vm547, %v545, %v358
        %v555 = vsel %vm547, %v546, %v360
        %vm556 = vcmask 130048
        %v557 = vsel %vm556, %v548, %v378
        %v558 = vsel %vm556, %v549, %v380
        %v559 = vsel %vm556, %v550, %v382
        %v560 = vsel %vm556, %v551, %v384
        %v561 = vsel %vm556, %v552, %v386
        %v562 = vsel %vm556, %v553, %v388
        %v563 = vsel %vm556, %v554, %v390
        %v564 = vsel %vm556, %v555, %v392
        %vm565 = vcmask 162816
        %v566 = vsel %vm565, %v557, %v410
        %v567 = vsel %vm565, %v558, %v412
        %v568 = vsel %vm565, %v559, %v414
        %v569 = vsel %vm565, %v560, %v416
        %v570 = vsel %vm565, %v561, %v418
        %v571 = vsel %vm565, %v562, %v420
        %v572 = vsel %vm565, %v563, %v422
        %v573 = vsel %vm565, %v564, %v424
        %vm574 = vcmask 195584
        %v575 = vsel %vm574, %v566, %v442
        %v576 = vsel %vm574, %v567, %v444
        %v577 = vsel %vm574, %v568, %v446
        %v578 = vsel %vm574, %v569, %v448
        %v579 = vsel %vm574, %v570, %v450
        %v580 = vsel %vm574, %v571, %v452
        %v581 = vsel %vm574, %v572, %v454
        %v582 = vsel %vm574, %v573, %v456
        %vm583 = vcmask 228352
        %v584 = vsel %vm583, %v575, %v474
        %v585 = vsel %vm583, %v576, %v476
        %v586 = vsel %vm583, %v577, %v478
        %v587 = vsel %vm583, %v578, %v480
        %v588 = vsel %vm583, %v579, %v482
        %v589 = vsel %vm583, %v580, %v484
        %v590 = vsel %vm583, %v581, %v486
        %v591 = vsel %vm583, %v582, %v488
        %vm592 = vcmask 261120
        %v593 = vsel %vm592, %v584, %v506
        %v594 = vsel %vm592, %v585, %v508
        %v595 = vsel %vm592, %v586, %v510
        %v596 = vsel %vm592, %v587, %v512
        %v597 = vsel %vm592, %v588, %v514
        %v598 = vsel %vm592, %v589, %v516
        %v599 = vsel %vm592, %v590, %v518
        %v600 = vsel %vm592, %v591, %v520
        %v601 = vld [vmem:[%s1] sm:$0xff]
        %v602 = vld [vmem:[%s1 + $0x8] sm:$0xff]
        %v603 = vld [vmem:[%s1 + $0x10] sm:$0xff]
        %v604 = vld [vmem:[%s1 + $0x18] sm:$0xff]
        %v605 = vld [vmem:[%s1 + $0x20] sm:$0xf]
        %v606 = vld [vmem:[%s3] sm:$0x1]
        %v607 = vperm.slane %v606, 0
        %vm608 = vcmask 293888
        %v610 = vsel %vm608, %v593, 0
        %v613 = vsel %vm608, %v594, 0
        %v616 = vsel %vm608, %v595, 0
        %v619 = vsel %vm608, %v596, 0
        %v622 = vsel %vm608, %v597, 0
        %v625 = vsel %vm608, %v598, 0
        %v628 = vsel %vm608, %v599, 0
        %v631 = vsel %vm608, %v600, 0
        %vm633 = vcmask 1043456
        %v635 = vsel %vm633, %v605, 0
        %637 = vmatpush.msra.mxu0 0.0
        %638 = vmatpush.msra.mxu0 0.0
        %639 = vmatpush.msra.mxu0 0.0
        %640 = vmatpush.msra.mxu0 0.0
        %641 = vmatpush.msra.mxu0 0.0
        %642 = vmatpush.msra.mxu0 0.0
        %643 = vmatpush.msra.mxu0 0.0
        %644 = vmatpush.msra.mxu0 0.0
        %645 = vmatpush.msra.mxu0 0.0
        %646 = vmatpush.msra.mxu0 0.0
        %647 = vmatpush.msra.mxu0 0.0
        %648 = vmatpush.msra.mxu0 %v635
        %649 = vmatpush.msra.mxu0 %v604
        %650 = vmatpush.msra.mxu0 %v603
        %651 = vmatpush.msra.mxu0 %v602
        %652 = vmatpush.msra.mxu0 %v601
        %653 = vmatmul.f32.gmra.mxu0 %v610
        %v654 = vpop.f32.mrf.mxu0
        %v655 = vadd.f32 %v607, %v654
        %656 = vmatmul.f32.gmra.mxu0 %v613
        %v657 = vpop.f32.mrf.mxu0
        %v658 = vadd.f32 %v607, %v657
        %659 = vmatmul.f32.gmra.mxu0 %v616
        %v660 = vpop.f32.mrf.mxu0
        %v661 = vadd.f32 %v607, %v660
        %662 = vmatmul.f32.gmra.mxu0 %v619
        %v663 = vpop.f32.mrf.mxu0
        %v664 = vadd.f32 %v607, %v663
        %665 = vmatmul.f32.gmra.mxu0 %v622
        %v666 = vpop.f32.mrf.mxu0
        %v667 = vadd.f32 %v607, %v666
        %668 = vmatmul.f32.gmra.mxu0 %v625
        %v669 = vpop.f32.mrf.mxu0
        %v670 = vadd.f32 %v607, %v669
        %671 = vmatmul.f32.gmra.mxu0 %v628
        %v672 = vpop.f32.mrf.mxu0
        %v673 = vadd.f32 %v607, %v672
        %674 = vmatmul.f32.gmra.mxu0 %v631
        %v675 = vpop.f32.mrf.mxu0
        %v676 = vadd.f32 %v607, %v675
        %677 = vdwg.mxu0
        %v678 = vld [vmem:[%s3 + $0x1] sm:$0x1]
        %vm679 = vcmp.gt.f32.partialorder %v655, 0.0
        %vm680 = vcmp.gt.f32.partialorder %v658, 0.0
        %vm681 = vcmp.gt.f32.partialorder %v661, 0.0
        %vm682 = vcmp.gt.f32.partialorder %v664, 0.0
        %vm683 = vcmp.gt.f32.partialorder %v667, 0.0
        %vm684 = vcmp.gt.f32.partialorder %v670, 0.0
        %vm685 = vcmp.gt.f32.partialorder %v673, 0.0
        %vm686 = vcmp.gt.f32.partialorder %v676, 0.0
        %v687 = vperm.slane %v678, 0
        %v688 = vmul.f32 %v687, %v655
        %v689 = vmul.f32 %v687, %v658
        %v690 = vmul.f32 %v687, %v661
        %v691 = vmul.f32 %v687, %v664
        %v692 = vmul.f32 %v687, %v667
        %v693 = vmul.f32 %v687, %v670
        %v694 = vmul.f32 %v687, %v673
        %v695 = vmul.f32 %v687, %v676
        %v696 = vsel %vm679, %v655, %v688
        %v697 = vsel %vm680, %v658, %v689
        %v698 = vsel %vm681, %v661, %v690
        %v699 = vsel %vm682, %v664, %v691
        %v700 = vsel %vm683, %v667, %v692
        %v701 = vsel %vm684, %v670, %v693
        %v702 = vsel %vm685, %v673, %v694
        %v703 = vsel %vm686, %v676, %v695
        %704 = vst.msk [vmem:[#allocation2] sm:$0xff] %vm538, 0.0
        %vm705 = vcmask 58368
        %706 = vst.msk [vmem:[#allocation2 + $0x8] sm:$0x3] %vm705, 0.0
        %707 = vst.msk [vmem:[#allocation2 + $0x10] sm:$0xff] %vm538, 0.0
        %708 = vst.msk [vmem:[#allocation2 + $0x18] sm:$0x3] %vm705, 0.0
        %709 = vst.msk [vmem:[#allocation2 + $0x20] sm:$0xff] %vm538, 0.0
        %710 = vst.msk [vmem:[#allocation2 + $0x28] sm:$0x3] %vm705, 0.0
        %711 = vst.msk [vmem:[#allocation2 + $0x30] sm:$0xff] %vm538, 0.0
        %712 = vst.msk [vmem:[#allocation2 + $0x38] sm:$0x3] %vm705, 0.0
        %713 = vst.msk [vmem:[#allocation2 + $0x40] sm:$0xff] %vm538, 0.0
        %714 = vst.msk [vmem:[#allocation2 + $0x48] sm:$0x3] %vm705, 0.0
        %715 = vst.msk [vmem:[#allocation2 + $0x50] sm:$0xff] %vm538, 0.0
        %716 = vst.msk [vmem:[#allocation2 + $0x58] sm:$0x3] %vm705, 0.0
        %717 = vst.msk [vmem:[#allocation2 + $0x60] sm:$0xff] %vm538, 0.0
        %718 = vst.msk [vmem:[#allocation2 + $0x68] sm:$0x3] %vm705, 0.0
        %719 = vst.msk [vmem:[#allocation2 + $0x70] sm:$0xff] %vm538, 0.0
        %720 = vst.msk [vmem:[#allocation2 + $0x78] sm:$0x3] %vm705, 0.0
        %721 = vst.msk [vmem:[#allocation2 + $0x80] sm:$0xff] %vm538, 0.0
        %722 = vst.msk [vmem:[#allocation2 + $0x88] sm:$0x3] %vm705, 0.0
        %723 = vst.msk [vmem:[#allocation2 + $0x90] sm:$0xff] %vm538, 0.0
        %724 = vst.msk [vmem:[#allocation2 + $0x98] sm:$0x3] %vm705, 0.0
        %s725 = scalar_lea.vmem [#allocation2], 16
        %726 = vst.msk [vmem:[%s725 + $0x1] sm:$0xff] %vm538, %v696
        %727 = vst.msk [vmem:[%s725 + $0x11] sm:$0xff] %vm538, %v697
        %728 = vst.msk [vmem:[%s725 + $0x21] sm:$0xff] %vm538, %v698
        %729 = vst.msk [vmem:[%s725 + $0x31] sm:$0xff] %vm538, %v699
        %730 = vst.msk [vmem:[%s725 + $0x41] sm:$0xff] %vm538, %v700
        %731 = vst.msk [vmem:[%s725 + $0x51] sm:$0xff] %vm538, %v701
        %732 = vst.msk [vmem:[%s725 + $0x61] sm:$0xff] %vm538, %v702
        %733 = vst.msk [vmem:[%s725 + $0x71] sm:$0xff] %vm538, %v703
        %v734 = vld [vmem:[#allocation2] sm:$0xff]
        %v735 = vld [vmem:[#allocation2 + $0x10] sm:$0xff]
        %v736 = vld [vmem:[#allocation2 + $0x20] sm:$0xff]
        %v737 = vld [vmem:[#allocation2 + $0x30] sm:$0xff]
        %v738 = vld [vmem:[#allocation2 + $0x40] sm:$0xff]
        %v739 = vld [vmem:[#allocation2 + $0x50] sm:$0xff]
        %v740 = vld [vmem:[#allocation2 + $0x60] sm:$0xff]
        %v741 = vld [vmem:[#allocation2 + $0x70] sm:$0xff]
        %v742 = vld [vmem:[#allocation2 + $0x1] sm:$0xff]
        %v743 = vld [vmem:[#allocation2 + $0x11] sm:$0xff]
        %v744 = vld [vmem:[#allocation2 + $0x21] sm:$0xff]
        %v745 = vld [vmem:[#allocation2 + $0x31] sm:$0xff]
        %v746 = vld [vmem:[#allocation2 + $0x41] sm:$0xff]
        %v747 = vld [vmem:[#allocation2 + $0x51] sm:$0xff]
        %v748 = vld [vmem:[#allocation2 + $0x61] sm:$0xff]
        %v749 = vld [vmem:[#allocation2 + $0x71] sm:$0xff]
        %v750 = vld [vmem:[#allocation2 + $0x2] sm:$0xff]
        %v751 = vld [vmem:[#allocation2 + $0x12] sm:$0xff]
        %v752 = vld [vmem:[#allocation2 + $0x22] sm:$0xff]
        %v753 = vld [vmem:[#allocation2 + $0x32] sm:$0xff]
        %v754 = vld [vmem:[#allocation2 + $0x42] sm:$0xff]
        %v755 = vld [vmem:[#allocation2 + $0x52] sm:$0xff]
        %v756 = vld [vmem:[#allocation2 + $0x62] sm:$0xff]
        %v757 = vld [vmem:[#allocation2 + $0x72] sm:$0xff]
        %v758 = vld [vmem:[%s725] sm:$0xff]
        %v759 = vld [vmem:[%s725 + $0x10] sm:$0xff]
        %v760 = vld [vmem:[%s725 + $0x20] sm:$0xff]
        %v761 = vld [vmem:[%s725 + $0x30] sm:$0xff]
        %v762 = vld [vmem:[%s725 + $0x40] sm:$0xff]
        %v763 = vld [vmem:[%s725 + $0x50] sm:$0xff]
        %v764 = vld [vmem:[%s725 + $0x60] sm:$0xff]
        %v765 = vld [vmem:[%s725 + $0x70] sm:$0xff]
        %v766 = vld [vmem:[%s725 + $0x1] sm:$0xff]
        %v767 = vld [vmem:[%s725 + $0x11] sm:$0xff]
        %v768 = vld [vmem:[%s725 + $0x21] sm:$0xff]
        %v769 = vld [vmem:[%s725 + $0x31] sm:$0xff]
        %v770 = vld [vmem:[%s725 + $0x41] sm:$0xff]
        %v771 = vld [vmem:[%s725 + $0x51] sm:$0xff]
        %v772 = vld [vmem:[%s725 + $0x61] sm:$0xff]
        %v773 = vld [vmem:[%s725 + $0x71] sm:$0xff]
        %v774 = vld [vmem:[%s725 + $0x2] sm:$0xff]
        %v775 = vld [vmem:[%s725 + $0x12] sm:$0xff]
        %v776 = vld [vmem:[%s725 + $0x22] sm:$0xff]
        %v777 = vld [vmem:[%s725 + $0x32] sm:$0xff]
        %v778 = vld [vmem:[%s725 + $0x42] sm:$0xff]
        %v779 = vld [vmem:[%s725 + $0x52] sm:$0xff]
        %v780 = vld [vmem:[%s725 + $0x62] sm:$0xff]
        %v781 = vld [vmem:[%s725 + $0x72] sm:$0xff]
        %s782 = scalar_lea.vmem [#allocation2], 32
        %v783 = vld [vmem:[%s782] sm:$0xff]
        %v784 = vld [vmem:[%s782 + $0x10] sm:$0xff]
        %v785 = vld [vmem:[%s782 + $0x20] sm:$0xff]
        %v786 = vld [vmem:[%s782 + $0x30] sm:$0xff]
        %v787 = vld [vmem:[%s782 + $0x40] sm:$0xff]
        %v788 = vld [vmem:[%s782 + $0x50] sm:$0xff]
        %v789 = vld [vmem:[%s782 + $0x60] sm:$0xff]
        %v790 = vld [vmem:[%s782 + $0x70] sm:$0xff]
        %v791 = vld [vmem:[%s782 + $0x1] sm:$0xff]
        %v792 = vld [vmem:[%s782 + $0x11] sm:$0xff]
        %v793 = vld [vmem:[%s782 + $0x21] sm:$0xff]
        %v794 = vld [vmem:[%s782 + $0x31] sm:$0xff]
        %v795 = vld [vmem:[%s782 + $0x41] sm:$0xff]
        %v796 = vld [vmem:[%s782 + $0x51] sm:$0xff]
        %v797 = vld [vmem:[%s782 + $0x61] sm:$0xff]
        %v798 = vld [vmem:[%s782 + $0x71] sm:$0xff]
        %v799 = vld [vmem:[%s782 + $0x2] sm:$0xff]
        %v800 = vld [vmem:[%s782 + $0x12] sm:$0xff]
        %v801 = vld [vmem:[%s782 + $0x22] sm:$0xff]
        %v802 = vld [vmem:[%s782 + $0x32] sm:$0xff]
        %v803 = vld [vmem:[%s782 + $0x42] sm:$0xff]
        %v804 = vld [vmem:[%s782 + $0x52] sm:$0xff]
        %v805 = vld [vmem:[%s782 + $0x62] sm:$0xff]
        %v806 = vld [vmem:[%s782 + $0x72] sm:$0xff]
        %815 = vrot.lane.b32.xlu0 %v742, 8
        %v816 = vpop.permute.xlu0 %815
        %817 = vrot.lane.b32.xlu0 %v743, 8
        %v818 = vpop.permute.xlu0 %817
        %819 = vrot.lane.b32.xlu0 %v744, 8
        %v820 = vpop.permute.xlu0 %819
        %821 = vrot.lane.b32.xlu0 %v745, 8
        %v822 = vpop.permute.xlu0 %821
        %823 = vrot.lane.b32.xlu0 %v746, 8
        %v824 = vpop.permute.xlu0 %823
        %825 = vrot.lane.b32.xlu0 %v747, 8
        %v826 = vpop.permute.xlu0 %825
        %827 = vrot.lane.b32.xlu0 %v748, 8
        %v828 = vpop.permute.xlu0 %827
        %829 = vrot.lane.b32.xlu0 %v749, 8
        %v830 = vpop.permute.xlu0 %829
        %847 = vrot.lane.b32.xlu0 %v750, 16
        %v848 = vpop.permute.xlu0 %847
        %849 = vrot.lane.b32.xlu0 %v751, 16
        %v850 = vpop.permute.xlu0 %849
        %851 = vrot.lane.b32.xlu0 %v752, 16
        %v852 = vpop.permute.xlu0 %851
        %853 = vrot.lane.b32.xlu0 %v753, 16
        %v854 = vpop.permute.xlu0 %853
        %855 = vrot.lane.b32.xlu0 %v754, 16
        %v856 = vpop.permute.xlu0 %855
        %857 = vrot.lane.b32.xlu0 %v755, 16
        %v858 = vpop.permute.xlu0 %857
        %859 = vrot.lane.b32.xlu0 %v756, 16
        %v860 = vpop.permute.xlu0 %859
        %861 = vrot.lane.b32.xlu0 %v757, 16
        %v862 = vpop.permute.xlu0 %861
        %879 = vrot.lane.b32.xlu0 %v758, 24
        %v880 = vpop.permute.xlu0 %879
        %881 = vrot.lane.b32.xlu0 %v759, 24
        %v882 = vpop.permute.xlu0 %881
        %883 = vrot.lane.b32.xlu0 %v760, 24
        %v884 = vpop.permute.xlu0 %883
        %885 = vrot.lane.b32.xlu0 %v761, 24
        %v886 = vpop.permute.xlu0 %885
        %887 = vrot.lane.b32.xlu0 %v762, 24
        %v888 = vpop.permute.xlu0 %887
        %889 = vrot.lane.b32.xlu0 %v763, 24
        %v890 = vpop.permute.xlu0 %889
        %891 = vrot.lane.b32.xlu0 %v764, 24
        %v892 = vpop.permute.xlu0 %891
        %893 = vrot.lane.b32.xlu0 %v765, 24
        %v894 = vpop.permute.xlu0 %893
        %911 = vrot.lane.b32.xlu0 %v766, 32
        %v912 = vpop.permute.xlu0 %911
        %913 = vrot.lane.b32.xlu0 %v767, 32
        %v914 = vpop.permute.xlu0 %913
        %915 = vrot.lane.b32.xlu0 %v768, 32
        %v916 = vpop.permute.xlu0 %915
        %917 = vrot.lane.b32.xlu0 %v769, 32
        %v918 = vpop.permute.xlu0 %917
        %919 = vrot.lane.b32.xlu0 %v770, 32
        %v920 = vpop.permute.xlu0 %919
        %921 = vrot.lane.b32.xlu0 %v771, 32
        %v922 = vpop.permute.xlu0 %921
        %923 = vrot.lane.b32.xlu0 %v772, 32
        %v924 = vpop.permute.xlu0 %923
        %925 = vrot.lane.b32.xlu0 %v773, 32
        %v926 = vpop.permute.xlu0 %925
        %943 = vrot.lane.b32.xlu0 %v774, 40
        %v944 = vpop.permute.xlu0 %943
        %945 = vrot.lane.b32.xlu0 %v775, 40
        %v946 = vpop.permute.xlu0 %945
        %947 = vrot.lane.b32.xlu0 %v776, 40
        %v948 = vpop.permute.xlu0 %947
        %949 = vrot.lane.b32.xlu0 %v777, 40
        %v950 = vpop.permute.xlu0 %949
        %951 = vrot.lane.b32.xlu0 %v778, 40
        %v952 = vpop.permute.xlu0 %951
        %953 = vrot.lane.b32.xlu0 %v779, 40
        %v954 = vpop.permute.xlu0 %953
        %955 = vrot.lane.b32.xlu0 %v780, 40
        %v956 = vpop.permute.xlu0 %955
        %957 = vrot.lane.b32.xlu0 %v781, 40
        %v958 = vpop.permute.xlu0 %957
        %975 = vrot.lane.b32.xlu0 %v783, 48
        %v976 = vpop.permute.xlu0 %975
        %977 = vrot.lane.b32.xlu0 %v784, 48
        %v978 = vpop.permute.xlu0 %977
        %979 = vrot.lane.b32.xlu0 %v785, 48
        %v980 = vpop.permute.xlu0 %979
        %981 = vrot.lane.b32.xlu0 %v786, 48
        %v982 = vpop.permute.xlu0 %981
        %983 = vrot.lane.b32.xlu0 %v787, 48
        %v984 = vpop.permute.xlu0 %983
        %985 = vrot.lane.b32.xlu0 %v788, 48
        %v986 = vpop.permute.xlu0 %985
        %987 = vrot.lane.b32.xlu0 %v789, 48
        %v988 = vpop.permute.xlu0 %987
        %989 = vrot.lane.b32.xlu0 %v790, 48
        %v990 = vpop.permute.xlu0 %989
        %1007 = vrot.lane.b32.xlu0 %v791, 56
        %v1008 = vpop.permute.xlu0 %1007
        %1009 = vrot.lane.b32.xlu0 %v792, 56
        %v1010 = vpop.permute.xlu0 %1009
        %1011 = vrot.lane.b32.xlu0 %v793, 56
        %v1012 = vpop.permute.xlu0 %1011
        %1013 = vrot.lane.b32.xlu0 %v794, 56
        %v1014 = vpop.permute.xlu0 %1013
        %1015 = vrot.lane.b32.xlu0 %v795, 56
        %v1016 = vpop.permute.xlu0 %1015
        %1017 = vrot.lane.b32.xlu0 %v796, 56
        %v1018 = vpop.permute.xlu0 %1017
        %1019 = vrot.lane.b32.xlu0 %v797, 56
        %v1020 = vpop.permute.xlu0 %1019
        %1021 = vrot.lane.b32.xlu0 %v798, 56
        %v1022 = vpop.permute.xlu0 %1021
        %1039 = vrot.lane.b32.xlu0 %v799, 64
        %v1040 = vpop.permute.xlu0 %1039
        %1041 = vrot.lane.b32.xlu0 %v800, 64
        %v1042 = vpop.permute.xlu0 %1041
        %1043 = vrot.lane.b32.xlu0 %v801, 64
        %v1044 = vpop.permute.xlu0 %1043
        %1045 = vrot.lane.b32.xlu0 %v802, 64
        %v1046 = vpop.permute.xlu0 %1045
        %1047 = vrot.lane.b32.xlu0 %v803, 64
        %v1048 = vpop.permute.xlu0 %1047
        %1049 = vrot.lane.b32.xlu0 %v804, 64
        %v1050 = vpop.permute.xlu0 %1049
        %1051 = vrot.lane.b32.xlu0 %v805, 64
        %v1052 = vpop.permute.xlu0 %1051
        %1053 = vrot.lane.b32.xlu0 %v806, 64
        %v1054 = vpop.permute.xlu0 %1053
        %v1063 = vsel %vm538, %v734, %v816
        %v1064 = vsel %vm538, %v735, %v818
        %v1065 = vsel %vm538, %v736, %v820
        %v1066 = vsel %vm538, %v737, %v822
        %v1067 = vsel %vm538, %v738, %v824
        %v1068 = vsel %vm538, %v739, %v826
        %v1069 = vsel %vm538, %v740, %v828
        %v1070 = vsel %vm538, %v741, %v830
        %v1071 = vsel %vm556, %v1063, %v848
        %v1072 = vsel %vm556, %v1064, %v850
        %v1073 = vsel %vm556, %v1065, %v852
        %v1074 = vsel %vm556, %v1066, %v854
        %v1075 = vsel %vm556, %v1067, %v856
        %v1076 = vsel %vm556, %v1068, %v858
        %v1077 = vsel %vm556, %v1069, %v860
        %v1078 = vsel %vm556, %v1070, %v862
        %v1079 = vsel %vm574, %v1071, %v880
        %v1080 = vsel %vm574, %v1072, %v882
        %v1081 = vsel %vm574, %v1073, %v884
        %v1082 = vsel %vm574, %v1074, %v886
        %v1083 = vsel %vm574, %v1075, %v888
        %v1084 = vsel %vm574, %v1076, %v890
        %v1085 = vsel %vm574, %v1077, %v892
        %v1086 = vsel %vm574, %v1078, %v894
        %v1087 = vsel %vm592, %v1079, %v912
        %v1088 = vsel %vm592, %v1080, %v914
        %v1089 = vsel %vm592, %v1081, %v916
        %v1090 = vsel %vm592, %v1082, %v918
        %v1091 = vsel %vm592, %v1083, %v920
        %v1092 = vsel %vm592, %v1084, %v922
        %v1093 = vsel %vm592, %v1085, %v924
        %v1094 = vsel %vm592, %v1086, %v926
        %vm1095 = vcmask 326656
        %v1096 = vsel %vm1095, %v1087, %v944
        %v1097 = vsel %vm1095, %v1088, %v946
        %v1098 = vsel %vm1095, %v1089, %v948
        %v1099 = vsel %vm1095, %v1090, %v950
        %v1100 = vsel %vm1095, %v1091, %v952
        %v1101 = vsel %vm1095, %v1092, %v954
        %v1102 = vsel %vm1095, %v1093, %v956
        %v1103 = vsel %vm1095, %v1094, %v958
        %vm1104 = vcmask 392192
        %v1105 = vsel %vm1104, %v1096, %v976
        %v1106 = vsel %vm1104, %v1097, %v978
        %v1107 = vsel %vm1104, %v1098, %v980
        %v1108 = vsel %vm1104, %v1099, %v982
        %v1109 = vsel %vm1104, %v1100, %v984
        %v1110 = vsel %vm1104, %v1101, %v986
        %v1111 = vsel %vm1104, %v1102, %v988
        %v1112 = vsel %vm1104, %v1103, %v990
        %vm1113 = vcmask 457728
        %v1114 = vsel %vm1113, %v1105, %v1008
        %v1115 = vsel %vm1113, %v1106, %v1010
        %v1116 = vsel %vm1113, %v1107, %v1012
        %v1117 = vsel %vm1113, %v1108, %v1014
        %v1118 = vsel %vm1113, %v1109, %v1016
        %v1119 = vsel %vm1113, %v1110, %v1018
        %v1120 = vsel %vm1113, %v1111, %v1020
        %v1121 = vsel %vm1113, %v1112, %v1022
        %vm1122 = vcmask 523264
        %v1123 = vsel %vm1122, %v1114, %v1040
        %v1124 = vsel %vm1122, %v1115, %v1042
        %v1125 = vsel %vm1122, %v1116, %v1044
        %v1126 = vsel %vm1122, %v1117, %v1046
        %v1127 = vsel %vm1122, %v1118, %v1048
        %v1128 = vsel %vm1122, %v1119, %v1050
        %v1129 = vsel %vm1122, %v1120, %v1052
        %v1130 = vsel %vm1122, %v1121, %v1054
        %v1131 = vld [vmem:[%s2] sm:$0xff]
        %v1132 = vld [vmem:[%s2 + $0x8] sm:$0xff]
        %v1133 = vld [vmem:[%s2 + $0x10] sm:$0xff]
        %v1134 = vld [vmem:[%s2 + $0x18] sm:$0xff]
        %v1135 = vld [vmem:[%s2 + $0x20] sm:$0xff]
        %v1136 = vld [vmem:[%s2 + $0x28] sm:$0xff]
        %v1137 = vld [vmem:[%s2 + $0x30] sm:$0xff]
        %v1138 = vld [vmem:[%s2 + $0x38] sm:$0xff]
        %v1139 = vld [vmem:[%s2 + $0x40] sm:$0xff]
        %v1140 = vld [vmem:[%s3 + $0x2] sm:$0x1]
        %v1141 = vperm.slane %v1140, 0
        %vm1142 = vcmask 588800
        %v1144 = vsel %vm1142, %v1123, 0
        %v1147 = vsel %vm1142, %v1124, 0
        %v1150 = vsel %vm1142, %v1125, 0
        %v1153 = vsel %vm1142, %v1126, 0
        %v1156 = vsel %vm1142, %v1127, 0
        %v1159 = vsel %vm1142, %v1128, 0
        %v1162 = vsel %vm1142, %v1129, 0
        %v1165 = vsel %vm1142, %v1130, 0
        %1167 = vmatpush.msra.mxu0 0.0
        %1168 = vmatpush.msra.mxu0 0.0
        %1169 = vmatpush.msra.mxu0 0.0
        %1170 = vmatpush.msra.mxu0 0.0
        %1171 = vmatpush.msra.mxu0 0.0
        %1172 = vmatpush.msra.mxu0 0.0
        %1173 = vmatpush.msra.mxu0 0.0
        %1174 = vmatpush.msra.mxu0 %v1139
        %1175 = vmatpush.msra.mxu0 %v1138
        %1176 = vmatpush.msra.mxu0 %v1137
        %1177 = vmatpush.msra.mxu0 %v1136
        %1178 = vmatpush.msra.mxu0 %v1135
        %1179 = vmatpush.msra.mxu0 %v1134
        %1180 = vmatpush.msra.mxu0 %v1133
        %1181 = vmatpush.msra.mxu0 %v1132
        %1182 = vmatpush.msra.mxu0 %v1131
        %1183 = vmatmul.f32.gmra.mxu0 %v1144
        %v1184 = vpop.f32.mrf.mxu0
        %v1185 = vadd.f32 %v1141, %v1184
        %1186 = vmatmul.f32.gmra.mxu0 %v1147
        %v1187 = vpop.f32.mrf.mxu0
        %v1188 = vadd.f32 %v1141, %v1187
        %1189 = vmatmul.f32.gmra.mxu0 %v1150
        %v1190 = vpop.f32.mrf.mxu0
        %v1191 = vadd.f32 %v1141, %v1190
        %1192 = vmatmul.f32.gmra.mxu0 %v1153
        %v1193 = vpop.f32.mrf.mxu0
        %v1194 = vadd.f32 %v1141, %v1193
        %1195 = vmatmul.f32.gmra.mxu0 %v1156
        %v1196 = vpop.f32.mrf.mxu0
        %v1197 = vadd.f32 %v1141, %v1196
        %1198 = vmatmul.f32.gmra.mxu0 %v1159
        %v1199 = vpop.f32.mrf.mxu0
        %v1200 = vadd.f32 %v1141, %v1199
        %1201 = vmatmul.f32.gmra.mxu0 %v1162
        %v1202 = vpop.f32.mrf.mxu0
        %v1203 = vadd.f32 %v1141, %v1202
        %1204 = vmatmul.f32.gmra.mxu0 %v1165
        %v1205 = vpop.f32.mrf.mxu0
        %v1206 = vadd.f32 %v1141, %v1205
        %1207 = vdwg.mxu0
        %v1208 = vld [vmem:[%s3 + $0x3] sm:$0x1]
        %vm1209 = vcmp.gt.f32.partialorder %v1185, 0.0
        %vm1210 = vcmp.gt.f32.partialorder %v1188, 0.0
        %vm1211 = vcmp.gt.f32.partialorder %v1191, 0.0
        %vm1212 = vcmp.gt.f32.partialorder %v1194, 0.0
        %vm1213 = vcmp.gt.f32.partialorder %v1197, 0.0
        %vm1214 = vcmp.gt.f32.partialorder %v1200, 0.0
        %vm1215 = vcmp.gt.f32.partialorder %v1203, 0.0
        %vm1216 = vcmp.gt.f32.partialorder %v1206, 0.0
        %v1217 = vperm.slane %v1208, 0
        %v1218 = vmul.f32 %v1217, %v1185
        %v1219 = vmul.f32 %v1217, %v1188
        %v1220 = vmul.f32 %v1217, %v1191
        %v1221 = vmul.f32 %v1217, %v1194
        %v1222 = vmul.f32 %v1217, %v1197
        %v1223 = vmul.f32 %v1217, %v1200
        %v1224 = vmul.f32 %v1217, %v1203
        %v1225 = vmul.f32 %v1217, %v1206
        %v1226 = vsel %vm1209, %v1185, %v1218
        %v1227 = vsel %vm1210, %v1188, %v1219
        %v1228 = vsel %vm1211, %v1191, %v1220
        %v1229 = vsel %vm1212, %v1194, %v1221
        %v1230 = vsel %vm1213, %v1197, %v1222
        %v1231 = vsel %vm1214, %v1200, %v1223
        %v1232 = vsel %vm1215, %v1203, %v1224
        %v1233 = vsel %vm1216, %v1206, %v1225
        %1234 = vxpose.xlu0.b32.start [1/16] %v1226, 128
        %1235 = vxpose.xlu0.b32.cont [2/16] %v1227, 128
        %1236 = vxpose.xlu0.b32.cont [3/16] %v1228, 128
        %1237 = vxpose.xlu0.b32.cont [4/16] %v1229, 128
        %1238 = vxpose.xlu0.b32.cont [5/16] %v1230, 128
        %1239 = vxpose.xlu0.b32.cont [6/16] %v1231, 128
        %1240 = vxpose.xlu0.b32.cont [7/16] %v1232, 128
        %1241 = vxpose.xlu0.b32.cont [8/16] %v1233, 128
        %1242 = vxpose.xlu0.b32.cont [9/16] 0.0, 128
        %1243 = vxpose.xlu0.b32.cont [10/16] 0.0, 128
        %1244 = vxpose.xlu0.b32.cont [11/16] 0.0, 128
        %1245 = vxpose.xlu0.b32.cont [12/16] 0.0, 128
        %1246 = vxpose.xlu0.b32.cont [13/16] 0.0, 128
        %1247 = vxpose.xlu0.b32.cont [14/16] 0.0, 128
        %1248 = vxpose.xlu0.b32.cont [15/16] 0.0, 128
        %1249 = vxpose.xlu0.b32.end [16/16] 0.0, 128
        %v1250 = vpop.trf.xlu0
        %v1251 = vpop.trf.xlu0
        %v1252 = vpop.trf.xlu0
        %v1253 = vpop.trf.xlu0
        %v1254 = vpop.trf.xlu0
        %v1255 = vpop.trf.xlu0
        %v1256 = vpop.trf.xlu0
        %v1257 = vpop.trf.xlu0
        %v1258 = vpop.trf.xlu0
        %v1259 = vpop.trf.xlu0
        %v1260 = vpop.trf.xlu0
        %v1261 = vpop.trf.xlu0
        %v1262 = vpop.trf.xlu0
        %v1263 = vpop.trf.xlu0
        %v1264 = vpop.trf.xlu0
        %v1265 = vpop.trf.xlu0
        %1266 = vst.msk [vmem:[%s190] sm:$0xff] %vm1122, %v1250
        %s1267 = sand.u32 %s115, 1
        %s1268 = scalar_lea.sflag [#allocation4], %s1267
        %s1269 = sand.u32 %s115, 1
        %s1270 = smul.addr %s1269, 8
        %s1271 = scalar_lea.vmem [#allocation3], %s1270
        // Predicated region
        $region37: #{tpu_custom_call.1} parent=35 // pred_check
          %p1272 = pneg %p125
        $region38: #{tpu_custom_call.1} parent=35 // pred_check_branch
          %1274 = sbr.rel (%p1272) target = $region40
        $region39: #{tpu_custom_call.1} parent=35 // pred_region
          %1276 = vsyncadd %s1268, 0
          %s1277 = smul.addr %s18, 8
          %s1278 = scalar_lea.hbm %s4, %s1277
          %s1280 = sshll.u32 %s1271, 4
          %s1281 = int_to_ptr.vmem [resolvable:$true] %s1280
          %s1282 = sshll.u32 %s1278, 4
          %s1283 = int_to_ptr.hbm [resolvable:$true] %s1282
          %1285 = dma.vmem_to_hbm [thread:$0]  %s1281, 128, %s1283, %s1268
        $region40: #{tpu_custom_call.1} parent=35 // pred_fallthru
          _
      $region36: #{tpu_custom_call.1} parent=5 // pred_fallthru
        _
      %p1286 = scmp.le.s32.totalorder 2, %s13
      // Predicated region
      $region41: #{tpu_custom_call.1} parent=5 // pred_check
        %p1287 = pneg %p1286
      $region42: #{tpu_custom_call.1} parent=5 // pred_check_branch
        %1289 = sbr.rel (%p1287) target = $region44
      $region43: #{tpu_custom_call.1} parent=5 // pred_region
        %s1290 = ssub.s32 %s13, 2
        // Predicated region
        $region45: #{tpu_custom_call.1} parent=43 // pred_check
          %p1291 = pneg %p131
        $region46: #{tpu_custom_call.1} parent=43 // pred_check_branch
          %1293 = sbr.rel (%p1291) target = $region48
        $region47: #{tpu_custom_call.1} parent=43 // pred_region
          %s1294 = sand.u32 %s116, 1
          %s1295 = scalar_lea.sflag [#allocation4], %s1294
          %s1296 = sand.u32 %s116, 1
          %s1297 = smul.addr %s1296, 8
          %s1298 = scalar_lea.vmem [#allocation3], %s1297
          %1300 = dma.done %s1295, 128
        $region48: #{tpu_custom_call.1} parent=43 // pred_fallthru
          _
      $region44: #{tpu_custom_call.1} parent=5 // pred_fallthru
        _
    $region6: #{tpu_custom_call.1} parent=1 // loop_footer
      %s17 = sadd.s32 1, %s13
    $region7: #{tpu_custom_call.1} parent=1 // loop_footer_branch
      %12 = sbr.rel target = $region3
    $region8: #{tpu_custom_call.1} parent=1 // loop_exit
      _
    %1301 = vsyncpa [#allocation4], 1
    %s1302 = scalar_lea.sflag [#allocation4], 1
    %1303 = vsyncpa %s1302, 1

</llo_original>
